<compile_context>
chip_gen: v7x
topology: tpu7x:2x2x1
jax: 0.10.0
libtpu: 0.0.40
codegen_flags: <defaults>
</compile_context>

<pallas_src>
import functools

import jax
import jax.numpy as jnp
from jax.experimental import pallas as pl
from jax.experimental.pallas import tpu as pltpu

IN_DIM = 500        # fc input features (fixed by the module)
MID_DIM = 100       # fc output features
MID_PAD = 128       # hidden padded to one 128-lane tile
LANE = 128
MAX_TB = 512        # batch tile (multiple of 16; ~85% of HBM roofline per sweep)
NEG_INF = jnp.float32(-1e30)


def _round_up(n, m):
    return ((n + m - 1) // m) * m


def label_kernel(x_ref, w1_ref, b1_ref, w2_ref, b2_ref, o_ref):
    # x_ref:  (TB, 500)       f32   child_enc batch tile
    # w1_ref: (500, 128)      bf16  fc.weight^T, out dim zero-padded 100->128
    # b1_ref: (1, 128)        f32   fc.bias, zero-padded
    # w2_ref: (128, L_PAD)    bf16  map_label.weight^T, zero-padded
    # b2_ref: (1, L_PAD)      f32   map_label.bias, padded slots = -1e30 (mask)
    # o_ref:  (TB, L_PAD)     f32   log_softmax(logits); padded cols ~ -1e30
    x = x_ref[...].astype(jnp.bfloat16)                      # cast fused in-kernel

    # h = relu(x @ W1 + b1): bf16 MXU inputs, f32 accumulation / elementwise.
    h = jnp.dot(x, w1_ref[...], preferred_element_type=jnp.float32)
    h = jnp.maximum(h + b1_ref[...], 0.0)                    # (TB, 128) f32

    # logits = h @ W2 + b2.  Padded label columns get -1e30 straight from the
    # bias (their weight columns are zero), so no explicit mask is needed.
    logits = jnp.dot(h.astype(jnp.bfloat16), w2_ref[...],
                     preferred_element_type=jnp.float32)
    logits = logits + b2_ref[...]                            # (TB, L_PAD)

    # log_softmax over dim 1 (padded cols underflow to exp(.)=0, no NaN).
    m = jnp.max(logits, axis=1, keepdims=True)
    shifted = logits - m
    lse = jnp.log(jnp.sum(jnp.exp(shifted), axis=1, keepdims=True))
    o_ref[...] = shifted - lse


def prepare_params(fc_weight, fc_bias, map_weight, map_bias):
    """One-time (init-time) parameter prep: transpose to (in, out) layout,
    zero-pad to lane-dense shapes, bake the padded-label mask into b2, and
    cast MXU operands to bf16.  NOT part of the per-call path."""
    label_size = map_weight.shape[0]
    l_pad = _round_up(label_size, LANE)

    w1t = jnp.zeros((IN_DIM, MID_PAD), jnp.bfloat16)
    w1t = w1t.at[:, :MID_DIM].set(fc_weight.T.astype(jnp.bfloat16))
    b1p = jnp.zeros((1, MID_PAD), jnp.float32)
    b1p = b1p.at[0, :MID_DIM].set(fc_bias.astype(jnp.float32))

    w2t = jnp.zeros((MID_PAD, l_pad), jnp.bfloat16)
    w2t = w2t.at[:MID_DIM, :label_size].set(map_weight.T.astype(jnp.bfloat16))
    # Mask padded label columns by baking -1e30 into the bias (free in-kernel).
    b2p = jnp.full((1, l_pad), NEG_INF, jnp.float32)
    b2p = b2p.at[0, :label_size].set(map_bias.astype(jnp.float32))

    return w1t, b1p, w2t, b2p


@functools.partial(jax.jit, static_argnames=("label_size",))
def label_forward(parent_enc, child_enc, w1t, b1p, w2t, b2p, *, label_size):
    """parent_enc is unused by the original module's forward (kept for API parity)."""
    del parent_enc
    B = child_enc.shape[0]
    l_pad = w2t.shape[1]

    # Batch tile: multiple of 16 (bf16 sublane pack) for unmasked full-vst
    # stores; cap at MAX_TB so per-step VMEM stays small on every generation.
    b16 = _round_up(B, 16)
    if b16 <= MAX_TB:
        tb, b_pad = b16, b16
    else:
        tb, b_pad = MAX_TB, _round_up(B, MAX_TB)

    x = child_enc
    if b_pad != B:
        # Only when B is not already tile-aligned; padded rows are row-wise
        # independent garbage and are dropped by the final slice.
        x = jnp.pad(x, ((0, b_pad - B), (0, 0)))

    out = pl.pallas_call(
        label_kernel,
        out_shape=jax.ShapeDtypeStruct((b_pad, l_pad), jnp.float32),
        grid_spec=pl.GridSpec(
            grid=(b_pad // tb,),
            in_specs=[
                pl.BlockSpec((tb, IN_DIM), lambda i: (i, 0)),        # x tile
                pl.BlockSpec((IN_DIM, MID_PAD), lambda i: (0, 0)),   # W1 resident
                pl.BlockSpec((1, MID_PAD), lambda i: (0, 0)),        # b1 resident
                pl.BlockSpec((MID_PAD, l_pad), lambda i: (0, 0)),    # W2 resident
                pl.BlockSpec((1, l_pad), lambda i: (0, 0)),          # b2 resident
            ],
            out_specs=pl.BlockSpec((tb, l_pad), lambda i: (i, 0)),
        ),
        compiler_params=pltpu.CompilerParams(
            # Batch tiles are independent -> shard across v7x's 2 TensorCores.
            dimension_semantics=("parallel",),
        ),
    )(x, w1t, b1p, w2t, b2p)

    # Consumers that accept the padded (b_pad, 128) buffer may skip this slice.
    return out[:B, :label_size]


def label_reference(parent_enc, child_enc, fc_weight, fc_bias, map_weight, map_bias):
    """Pure-JAX f32 reference mirroring the PyTorch forward."""
    del parent_enc
    h = jax.nn.relu(child_enc @ fc_weight.T + fc_bias)
    logits = h @ map_weight.T + map_bias
    return jax.nn.log_softmax(logits, axis=1)


if __name__ == "__main__":
    key = jax.random.PRNGKey(0)
    k_w1, k_b1, k_w2, k_b2, k_p, k_c = jax.random.split(key, 6)

    labels = [f"label_{i}" for i in range(10)]
    label_size = len(labels)
    B = 2

    # Deterministic synthetic parameters (torch Linear layout: (out, in)).
    bound1 = 1.0 / (IN_DIM ** 0.5)
    fc_weight = jax.random.uniform(
        k_w1, (MID_DIM, IN_DIM), jnp.float32, minval=-bound1, maxval=bound1)
    fc_bias = jax.random.uniform(
        k_b1, (MID_DIM,), jnp.float32, minval=-bound1, maxval=bound1)
    bound2 = 1.0 / (MID_DIM ** 0.5)
    map_weight = jax.random.uniform(
        k_w2, (label_size, MID_DIM), jnp.float32, minval=-bound2, maxval=bound2)
    map_bias = jax.random.uniform(
        k_b2, (label_size,), jnp.float32, minval=-bound2, maxval=bound2)

    parent_enc = jax.random.normal(k_p, (B, IN_DIM), jnp.float32)
    child_enc = jax.random.normal(k_c, (B, IN_DIM), jnp.float32)

    # One-time parameter prep (outside the per-call path).
    w1t, b1p, w2t, b2p = prepare_params(fc_weight, fc_bias, map_weight, map_bias)

    prob = label_forward(parent_enc, child_enc, w1t, b1p, w2t, b2p,
                         label_size=label_size)
    prob = jax.block_until_ready(prob)

    ref = label_reference(parent_enc, child_enc,
                          fc_weight, fc_bias, map_weight, map_bias)
    assert prob.shape == (B, label_size)
    # bf16 MXU inputs + f32 accumulation -> small, bounded deviation from f32 ref.
    max_err = jnp.max(jnp.abs(prob - ref))
    assert jnp.allclose(prob, ref, atol=3e-2, rtol=3e-2), f"max abs err {max_err}"

    print("KERNEL_OK")
</pallas_src>

<mosaic_0001>
module attributes {stable_mosaic.version = 11 : i64} {
  func.func @label_kernel(%arg0: i32, %arg1: memref<16x500xf32, #tpu.memory_space<vmem>>, %arg2: memref<500x128xbf16, #tpu.memory_space<vmem>>, %arg3: memref<1x128xf32, #tpu.memory_space<vmem>>, %arg4: memref<128x128xbf16, #tpu.memory_space<vmem>>, %arg5: memref<1x128xf32, #tpu.memory_space<vmem>>, %arg6: memref<16x128xf32, #tpu.memory_space<vmem>>) attributes {dimension_semantics = [#tpu.dimension_semantics<parallel>], iteration_bounds = array<i64: 1>, scalar_prefetch = 0 : i64, scratch_operands = 0 : i64, tpu.core_type = #tpu.core_type<tc>, window_params = [{transform_indices = @transform_0, window_bounds = array<i64: 16, 500>}, {pipeline_mode = #tpu.pipeline_mode<synchronous>, transform_indices = @transform_1, window_bounds = array<i64: 500, 128>}, {pipeline_mode = #tpu.pipeline_mode<synchronous>, transform_indices = @transform_2, window_bounds = array<i64: 1, 128>}, {pipeline_mode = #tpu.pipeline_mode<synchronous>, transform_indices = @transform_3, window_bounds = array<i64: 128, 128>}, {pipeline_mode = #tpu.pipeline_mode<synchronous>, transform_indices = @transform_4, window_bounds = array<i64: 1, 128>}, {transform_indices = @transform_5, window_bounds = array<i64: 16, 128>}]} {
    %c0 = arith.constant 0 : index
    %c0_0 = arith.constant 0 : index
    %0 = vector.load %arg1[%c0, %c0_0] : memref<16x500xf32, #tpu.memory_space<vmem>>, vector<16x500xf32>
    %1 = arith.truncf %0 : vector<16x500xf32> to vector<16x500xbf16>
    %c0_1 = arith.constant 0 : index
    %c0_2 = arith.constant 0 : index
    %2 = vector.load %arg2[%c0_1, %c0_2] : memref<500x128xbf16, #tpu.memory_space<vmem>>, vector<500x128xbf16>
    %cst = arith.constant dense<0.000000e+00> : vector<16x128xf32>
    %3 = tpu.matmul %1, %2, %cst {dimension_numbers = #tpu.dot_dimension_numbers<[1], [0], [0], [1], [0, 0, 1, 1], [], []>} : vector<16x500xbf16>, vector<500x128xbf16>, vector<16x128xf32> -> vector<16x128xf32>
    %c0_3 = arith.constant 0 : index
    %c0_4 = arith.constant 0 : index
    %4 = vector.load %arg3[%c0_3, %c0_4] : memref<1x128xf32, #tpu.memory_space<vmem>>, vector<1x128xf32>
    %5 = vector.broadcast %4 : vector<1x128xf32> to vector<16x128xf32>
    %6 = arith.addf %3, %5 : vector<16x128xf32>
    %cst_5 = arith.constant 0.000000e+00 : f32
    %7 = vector.broadcast %cst_5 : f32 to vector<16x128xf32>
    %8 = arith.maximumf %6, %7 : vector<16x128xf32>
    %9 = arith.truncf %8 : vector<16x128xf32> to vector<16x128xbf16>
    %c0_6 = arith.constant 0 : index
    %c0_7 = arith.constant 0 : index
    %10 = vector.load %arg4[%c0_6, %c0_7] : memref<128x128xbf16, #tpu.memory_space<vmem>>, vector<128x128xbf16>
    %cst_8 = arith.constant dense<0.000000e+00> : vector<16x128xf32>
    %11 = tpu.matmul %9, %10, %cst_8 {dimension_numbers = #tpu.dot_dimension_numbers<[1], [0], [0], [1], [0, 0, 1, 1], [], []>} : vector<16x128xbf16>, vector<128x128xbf16>, vector<16x128xf32> -> vector<16x128xf32>
    %c0_9 = arith.constant 0 : index
    %c0_10 = arith.constant 0 : index
    %12 = vector.load %arg5[%c0_9, %c0_10] : memref<1x128xf32, #tpu.memory_space<vmem>>, vector<1x128xf32>
    %13 = vector.broadcast %12 : vector<1x128xf32> to vector<16x128xf32>
    %14 = arith.addf %11, %13 : vector<16x128xf32>
    %cst_11 = arith.constant dense<0xFF800000> : vector<16xf32>
    %15 = vector.multi_reduction <maximumf>, %14, %cst_11 [1] : vector<16x128xf32> to vector<16xf32>
    %16 = vector.shape_cast %15 : vector<16xf32> to vector<16x1xf32>
    %17 = vector.broadcast %16 : vector<16x1xf32> to vector<16x128xf32>
    %18 = arith.subf %14, %17 : vector<16x128xf32>
    %19 = math.exp %18 : vector<16x128xf32>
    %cst_12 = arith.constant dense<0.000000e+00> : vector<16xf32>
    %20 = vector.multi_reduction <add>, %19, %cst_12 [1] : vector<16x128xf32> to vector<16xf32>
    %21 = vector.shape_cast %20 : vector<16xf32> to vector<16x1xf32>
    %22 = math.log %21 : vector<16x1xf32>
    %23 = vector.broadcast %22 : vector<16x1xf32> to vector<16x128xf32>
    %24 = arith.subf %18, %23 : vector<16x128xf32>
    %c0_13 = arith.constant 0 : index
    %c0_14 = arith.constant 0 : index
    %25 = vector.load %arg6[%c0_13, %c0_14] : memref<16x128xf32, #tpu.memory_space<vmem>>, vector<16x128xf32>
    tpu.vector_store %arg6[%c0_13, %c0_14], %24 {strides = array<i32>} : memref<16x128xf32, #tpu.memory_space<vmem>>, vector<16x128xf32>,
    return
  }
  func.func @transform_0(%arg0: i32) -> (i32, i32) {
    %c0_i32 = arith.constant 0 : i32
    %c0_i32_0 = arith.constant 0 : i32
    return %arg0, %c0_i32 : i32, i32
  }
  func.func @transform_1(%arg0: i32) -> (i32, i32) {
    %c0_i32 = arith.constant 0 : i32
    %c0_i32_0 = arith.constant 0 : i32
    %c0_i32_1 = arith.constant 0 : i32
    return %c0_i32, %c0_i32_0 : i32, i32
  }
  func.func @transform_2(%arg0: i32) -> (i32, i32) {
    %c0_i32 = arith.constant 0 : i32
    %c0_i32_0 = arith.constant 0 : i32
    %c0_i32_1 = arith.constant 0 : i32
    return %c0_i32, %c0_i32_0 : i32, i32
  }
  func.func @transform_3(%arg0: i32) -> (i32, i32) {
    %c0_i32 = arith.constant 0 : i32
    %c0_i32_0 = arith.constant 0 : i32
    %c0_i32_1 = arith.constant 0 : i32
    return %c0_i32, %c0_i32_0 : i32, i32
  }
  func.func @transform_4(%arg0: i32) -> (i32, i32) {
    %c0_i32 = arith.constant 0 : i32
    %c0_i32_0 = arith.constant 0 : i32
    %c0_i32_1 = arith.constant 0 : i32
    return %c0_i32, %c0_i32_0 : i32, i32
  }
  func.func @transform_5(%arg0: i32) -> (i32, i32) {
    %c0_i32 = arith.constant 0 : i32
    %c0_i32_0 = arith.constant 0 : i32
    return %arg0, %c0_i32 : i32, i32
  }
}

</mosaic_0001>

<llo_original>
// kernel: label_forward.1
$region0: #{label_forward.1}
  #allocation0 [shape = 'u32[]', space=smem, size = 0x4, offset = 0x4, fixed_abs, tag = 'smem constant byte address 0x4 - core index']
  #allocation1 [shape = 'u32[144,128]{1,0:T(1,128)}', space=vmem, size = 0x12000, scoped, tag = 'internal scratch']
  %s0 = inlined_call_operand.vmem [shape: f32[16,500], index: 0, kind: input, shape index: {}]
  %s1 = inlined_call_operand.hbm [shape: bf16[500,128], index: 1, kind: input, shape index: {}]
  %s2 = inlined_call_operand.vmem [shape: f32[1,128], index: 2, kind: input, shape index: {}]
  %s3 = inlined_call_operand.vmem [shape: bf16[128,128], index: 3, kind: input, shape index: {}]
  %s4 = inlined_call_operand.vmem [shape: f32[1,128], index: 4, kind: input, shape index: {}]
  %s5 = inlined_call_operand.vmem [shape: f32[16,128], index: 5, kind: output, shape index: {}]
  %s6 = sld [smem:[#allocation0]]
  $region34: #{label_forward.1} parent=0
    _
  %s8 = ssub.s32 1, %s6
  %s9 = scalar_select 0, %s8, %s6
  $region1: #{label_forward.1} parent=0
    #allocation2 [shape = 'u8[129024]{0}', space=vmem, size = 0x1f800, scoped, tag = 'input window, operand 1, single buffered']
    #allocation3 [shape = 's32[1]{0}', space=sflag, size = 0x4, scoped, tag = 'scoped memory for label_forward.1']
    %10 = vsyncpa [#allocation3], 0
    // Predicated region
    $region2: #{label_forward.1} parent=1 // pred_check
      _
    $region3: #{label_forward.1} parent=1 // pred_check_branch
      %12 = sbr.rel (0) target = $region5
    $region4: #{label_forward.1} parent=1 // pred_region
      _
    $region5: #{label_forward.1} parent=1 // pred_fallthru
      _
    // Predicated region
    $region6: #{label_forward.1} parent=1 // pred_check
      _
    $region7: #{label_forward.1} parent=1 // pred_check_branch
      %14 = sbr.rel (0) target = $region9
    $region8: #{label_forward.1} parent=1 // pred_region
      %s16 = ssub.s32 4032, 4032
      %17 = vsyncadd [#allocation3], %s16
      %s18 = sshll.u32 [#allocation2], 4
      %s19 = int_to_ptr.vmem [resolvable:$true] %s18
      %24 = dma.hbm_to_vmem [thread:$0]  %s1, 4032, %s19, [#allocation3], 64, 64, 4
    $region9: #{label_forward.1} parent=1 // pred_fallthru
      _
    // Predicated region
    $region10: #{label_forward.1} parent=1 // pred_check
      _
    $region11: #{label_forward.1} parent=1 // pred_check_branch
      %26 = sbr.rel (0) target = $region13
    $region12: #{label_forward.1} parent=1 // pred_region
      _
    $region13: #{label_forward.1} parent=1 // pred_fallthru
      _
    // Predicated region
    $region14: #{label_forward.1} parent=1 // pred_check
      _
    $region15: #{label_forward.1} parent=1 // pred_check_branch
      %28 = sbr.rel (0) target = $region17
    $region16: #{label_forward.1} parent=1 // pred_region
      _
    $region17: #{label_forward.1} parent=1 // pred_fallthru
      _
    // Predicated region
    $region18: #{label_forward.1} parent=1 // pred_check
      _
    $region19: #{label_forward.1} parent=1 // pred_check_branch
      %30 = sbr.rel (0) target = $region21
    $region20: #{label_forward.1} parent=1 // pred_region
      _
    $region21: #{label_forward.1} parent=1 // pred_fallthru
      _
    // Predicated region
    $region22: #{label_forward.1} parent=1 // pred_check
      _
    $region23: #{label_forward.1} parent=1 // pred_check_branch
      %32 = sbr.rel (0) target = $region25
    $region24: #{label_forward.1} parent=1 // pred_region
      %33 = dma.done [#allocation3], 4032
    $region25: #{label_forward.1} parent=1 // pred_fallthru
      _
    %v35 = vld [vmem:[%s0] sm:$0xff]
    %v36 = vld [vmem:[%s0 + $0x8] sm:$0xff]
    %v37 = vld [vmem:[%s0 + $0x10] sm:$0xff]
    %v38 = vld [vmem:[%s0 + $0x18] sm:$0xff]
    %v39 = vld [vmem:[%s0 + $0x20] sm:$0xff]
    %v40 = vld [vmem:[%s0 + $0x28] sm:$0xff]
    %v41 = vld [vmem:[%s0 + $0x30] sm:$0xff]
    %v42 = vld [vmem:[%s0 + $0x38] sm:$0xff]
    %v43 = vpack.c.bf16 %v39, %v35
    %v44 = vpack.c.bf16 %v40, %v36
    %v45 = vpack.c.bf16 %v41, %v37
    %v46 = vpack.c.bf16 %v42, %v38
    %v47 = vld [vmem:[#allocation2] sm:$0xf]
    %v48 = vld [vmem:[#allocation2 + $0x4] sm:$0xf]
    %v49 = vld [vmem:[#allocation2 + $0x8] sm:$0xf]
    %v50 = vld [vmem:[#allocation2 + $0xc] sm:$0xf]
    %v51 = vld [vmem:[#allocation2 + $0x10] sm:$0xf]
    %v52 = vld [vmem:[#allocation2 + $0x14] sm:$0xf]
    %v53 = vld [vmem:[#allocation2 + $0x18] sm:$0xf]
    %v54 = vld [vmem:[#allocation2 + $0x1c] sm:$0xf]
    %v55 = vld [vmem:[#allocation2 + $0x20] sm:$0xf]
    %v56 = vld [vmem:[#allocation2 + $0x24] sm:$0xf]
    %v57 = vld [vmem:[#allocation2 + $0x28] sm:$0xf]
    %v58 = vld [vmem:[#allocation2 + $0x2c] sm:$0xf]
    %v59 = vld [vmem:[#allocation2 + $0x30] sm:$0xf]
    %v60 = vld [vmem:[#allocation2 + $0x34] sm:$0xf]
    %v61 = vld [vmem:[#allocation2 + $0x38] sm:$0xf]
    %v62 = vld [vmem:[#allocation2 + $0x3c] sm:$0xf]
    %v63 = vld [vmem:[#allocation2 + $0x40] sm:$0xf]
    %v64 = vld [vmem:[#allocation2 + $0x44] sm:$0xf]
    %v65 = vld [vmem:[#allocation2 + $0x48] sm:$0xf]
    %v66 = vld [vmem:[#allocation2 + $0x4c] sm:$0xf]
    %v67 = vld [vmem:[#allocation2 + $0x50] sm:$0xf]
    %v68 = vld [vmem:[#allocation2 + $0x54] sm:$0xf]
    %v69 = vld [vmem:[#allocation2 + $0x58] sm:$0xf]
    %v70 = vld [vmem:[#allocation2 + $0x5c] sm:$0xf]
    %v71 = vld [vmem:[#allocation2 + $0x60] sm:$0xf]
    %v72 = vld [vmem:[#allocation2 + $0x64] sm:$0xf]
    %v73 = vld [vmem:[#allocation2 + $0x68] sm:$0xf]
    %v74 = vld [vmem:[#allocation2 + $0x6c] sm:$0xf]
    %v75 = vld [vmem:[#allocation2 + $0x70] sm:$0xf]
    %v76 = vld [vmem:[#allocation2 + $0x74] sm:$0xf]
    %v77 = vld [vmem:[#allocation2 + $0x78] sm:$0xf]
    %v78 = vld [vmem:[#allocation2 + $0x7c] sm:$0xf]
    %v79 = vld [vmem:[#allocation2 + $0x80] sm:$0xf]
    %v80 = vld [vmem:[#allocation2 + $0x84] sm:$0xf]
    %v81 = vld [vmem:[#allocation2 + $0x88] sm:$0xf]
    %v82 = vld [vmem:[#allocation2 + $0x8c] sm:$0xf]
    %v83 = vld [vmem:[#allocation2 + $0x90] sm:$0xf]
    %v84 = vld [vmem:[#allocation2 + $0x94] sm:$0xf]
    %v85 = vld [vmem:[#allocation2 + $0x98] sm:$0xf]
    %v86 = vld [vmem:[#allocation2 + $0x9c] sm:$0xf]
    %v87 = vld [vmem:[#allocation2 + $0xa0] sm:$0xf]
    %v88 = vld [vmem:[#allocation2 + $0xa4] sm:$0xf]
    %v89 = vld [vmem:[#allocation2 + $0xa8] sm:$0xf]
    %v90 = vld [vmem:[#allocation2 + $0xac] sm:$0xf]
    %v91 = vld [vmem:[#allocation2 + $0xb0] sm:$0xf]
    %v92 = vld [vmem:[#allocation2 + $0xb4] sm:$0xf]
    %v93 = vld [vmem:[#allocation2 + $0xb8] sm:$0xf]
    %v94 = vld [vmem:[#allocation2 + $0xbc] sm:$0xf]
    %v95 = vld [vmem:[#allocation2 + $0xc0] sm:$0xf]
    %v96 = vld [vmem:[#allocation2 + $0xc4] sm:$0xf]
    %v97 = vld [vmem:[#allocation2 + $0xc8] sm:$0xf]
    %v98 = vld [vmem:[#allocation2 + $0xcc] sm:$0xf]
    %v99 = vld [vmem:[#allocation2 + $0xd0] sm:$0xf]
    %v100 = vld [vmem:[#allocation2 + $0xd4] sm:$0xf]
    %v101 = vld [vmem:[#allocation2 + $0xd8] sm:$0xf]
    %v102 = vld [vmem:[#allocation2 + $0xdc] sm:$0xf]
    %v103 = vld [vmem:[#allocation2 + $0xe0] sm:$0xf]
    %v104 = vld [vmem:[#allocation2 + $0xe4] sm:$0xf]
    %v105 = vld [vmem:[#allocation2 + $0xe8] sm:$0xf]
    %v106 = vld [vmem:[#allocation2 + $0xec] sm:$0xf]
    %v107 = vld [vmem:[#allocation2 + $0xf0] sm:$0xf]
    %v108 = vld [vmem:[#allocation2 + $0xf4] sm:$0xf]
    %v109 = vld [vmem:[#allocation2 + $0xf8] sm:$0x3]
    %v110 = vld [vmem:[%s2] sm:$0x1]
    %v112 = vlaneseq
    %v113 = vshrl.u32 %v112, 7
    %v114 = vsub.s32 0, %v113
    %v115 = vrot.slane %v110, %v114
    %v180 = vunpack.c.l.b16 %v47
    %v181 = vunpack.c.l.b16 %v48
    %v182 = vunpack.c.l.b16 %v49
    %v183 = vunpack.c.l.b16 %v50
    %v184 = vunpack.c.l.b16 %v51
    %v185 = vunpack.c.l.b16 %v52
    %v186 = vunpack.c.l.b16 %v53
    %v187 = vunpack.c.l.b16 %v54
    %v188 = vunpack.c.l.b16 %v55
    %v189 = vunpack.c.l.b16 %v56
    %v190 = vunpack.c.l.b16 %v57
    %v191 = vunpack.c.l.b16 %v58
    %v192 = vunpack.c.l.b16 %v59
    %v193 = vunpack.c.l.b16 %v60
    %v194 = vunpack.c.l.b16 %v61
    %v195 = vunpack.c.l.b16 %v62
    %v196 = vunpack.c.l.b16 %v63
    %v197 = vunpack.c.l.b16 %v64
    %v198 = vunpack.c.l.b16 %v65
    %v199 = vunpack.c.l.b16 %v66
    %v200 = vunpack.c.l.b16 %v67
    %v201 = vunpack.c.l.b16 %v68
    %v202 = vunpack.c.l.b16 %v69
    %v203 = vunpack.c.l.b16 %v70
    %v204 = vunpack.c.l.b16 %v71
    %v205 = vunpack.c.l.b16 %v72
    %v206 = vunpack.c.l.b16 %v73
    %v207 = vunpack.c.l.b16 %v74
    %v208 = vunpack.c.l.b16 %v75
    %v209 = vunpack.c.l.b16 %v76
    %v210 = vunpack.c.l.b16 %v77
    %v211 = vunpack.c.l.b16 %v78
    %v212 = vunpack.c.l.b16 %v79
    %v213 = vunpack.c.l.b16 %v80
    %v214 = vunpack.c.l.b16 %v81
    %v215 = vunpack.c.l.b16 %v82
    %v216 = vunpack.c.l.b16 %v83
    %v217 = vunpack.c.l.b16 %v84
    %v218 = vunpack.c.l.b16 %v85
    %v219 = vunpack.c.l.b16 %v86
    %v220 = vunpack.c.l.b16 %v87
    %v221 = vunpack.c.l.b16 %v88
    %v222 = vunpack.c.l.b16 %v89
    %v223 = vunpack.c.l.b16 %v90
    %v224 = vunpack.c.l.b16 %v91
    %v225 = vunpack.c.l.b16 %v92
    %v226 = vunpack.c.l.b16 %v93
    %v227 = vunpack.c.l.b16 %v94
    %v228 = vunpack.c.l.b16 %v95
    %v229 = vunpack.c.l.b16 %v96
    %v230 = vunpack.c.l.b16 %v97
    %v231 = vunpack.c.l.b16 %v98
    %v232 = vunpack.c.l.b16 %v99
    %v233 = vunpack.c.l.b16 %v100
    %v234 = vunpack.c.l.b16 %v101
    %v235 = vunpack.c.l.b16 %v102
    %v236 = vunpack.c.l.b16 %v103
    %v237 = vunpack.c.l.b16 %v104
    %v238 = vunpack.c.l.b16 %v105
    %v239 = vunpack.c.l.b16 %v106
    %v240 = vunpack.c.l.b16 %v107
    %v241 = vunpack.c.l.b16 %v108
    %v242 = vunpack.c.l.b16 %v109
    %v243 = vpack.c.b16 %v181, %v180
    %v244 = vpack.c.b16 %v183, %v182
    %v245 = vpack.c.b16 %v185, %v184
    %v246 = vpack.c.b16 %v187, %v186
    %v247 = vpack.c.b16 %v189, %v188
    %v248 = vpack.c.b16 %v191, %v190
    %v249 = vpack.c.b16 %v193, %v192
    %v250 = vpack.c.b16 %v195, %v194
    %v251 = vpack.c.b16 %v197, %v196
    %v252 = vpack.c.b16 %v199, %v198
    %v253 = vpack.c.b16 %v201, %v200
    %v254 = vpack.c.b16 %v203, %v202
    %v255 = vpack.c.b16 %v205, %v204
    %v256 = vpack.c.b16 %v207, %v206
    %v257 = vpack.c.b16 %v209, %v208
    %v258 = vpack.c.b16 %v211, %v210
    %v259 = vpack.c.b16 %v213, %v212
    %v260 = vpack.c.b16 %v215, %v214
    %v261 = vpack.c.b16 %v217, %v216
    %v262 = vpack.c.b16 %v219, %v218
    %v263 = vpack.c.b16 %v221, %v220
    %v264 = vpack.c.b16 %v223, %v222
    %v265 = vpack.c.b16 %v225, %v224
    %v266 = vpack.c.b16 %v227, %v226
    %v267 = vpack.c.b16 %v229, %v228
    %v268 = vpack.c.b16 %v231, %v230
    %v269 = vpack.c.b16 %v233, %v232
    %v270 = vpack.c.b16 %v235, %v234
    %v271 = vpack.c.b16 %v237, %v236
    %v272 = vpack.c.b16 %v239, %v238
    %v273 = vpack.c.b16 %v241, %v240
    %v274 = vpack.c.b16 %v242, %v242
    %vm306 = vcmask 949248
    %v308 = vsel %vm306, %v46, 0
    %vm310 = vcmask 1041408
    %v312 = vsel %vm310, %v274, 0
    %314 = vmatprep.subr.bf16.mxu0 0
    %315 = vmatpush1.bf16.msra.mxu0 %v243
    %316 = vmatprep.subr.bf16.mxu0 0
    %317 = vmatpush1.bf16.msra.mxu0 %v244
    %318 = vmatprep.subr.bf16.mxu0 0
    %319 = vmatpush1.bf16.msra.mxu0 %v245
    %320 = vmatprep.subr.bf16.mxu0 0
    %321 = vmatpush1.bf16.msra.mxu0 %v246
    %322 = vmatprep.subr.bf16.mxu0 0
    %323 = vmatpush1.bf16.msra.mxu0 %v247
    %324 = vmatprep.subr.bf16.mxu0 0
    %325 = vmatpush1.bf16.msra.mxu0 %v248
    %326 = vmatprep.subr.bf16.mxu0 0
    %327 = vmatpush1.bf16.msra.mxu0 %v249
    %328 = vmatprep.subr.bf16.mxu0 0
    %329 = vmatpush1.bf16.msra.mxu0 %v250
    %330 = vmatprep.subr.bf16.mxu0 0
    %331 = vmatpush1.bf16.msra.mxu0 %v251
    %332 = vmatprep.subr.bf16.mxu0 0
    %333 = vmatpush1.bf16.msra.mxu0 %v252
    %334 = vmatprep.subr.bf16.mxu0 0
    %335 = vmatpush1.bf16.msra.mxu0 %v253
    %336 = vmatprep.subr.bf16.mxu0 0
    %337 = vmatpush1.bf16.msra.mxu0 %v254
    %338 = vmatprep.subr.bf16.mxu0 0
    %339 = vmatpush1.bf16.msra.mxu0 %v255
    %340 = vmatprep.subr.bf16.mxu0 0
    %341 = vmatpush1.bf16.msra.mxu0 %v256
    %342 = vmatprep.subr.bf16.mxu0 0
    %343 = vmatpush1.bf16.msra.mxu0 %v257
    %344 = vmatprep.subr.bf16.mxu0 0
    %345 = vmatpush1.bf16.msra.mxu0 %v258
    %346 = vmatprep.mubr.bf16.mxu0 %v44
    %347 = vmatmul.mubr.bf16.gmra.mrb[0].mxu0 %v43
    %v348 = vpop.f32.mrb[0].mxu0
    %v349 = vadd.f32 %v115, %v348
    %v350 = vpop.f32.mrb[0].mxu0
    %v351 = vpop.f32.mrb[0].mxu0
    %v352 = vadd.f32 %v115, %v351
    %v353 = vpop.f32.mrb[0].mxu0
    %354 = vdwg.mxu0
    %355 = vmatprep.subr.bf16.mxu0 0
    %356 = vmatpush1.bf16.msra.mxu0 %v259
    %357 = vmatprep.subr.bf16.mxu0 0
    %358 = vmatpush1.bf16.msra.mxu0 %v260
    %359 = vmatprep.subr.bf16.mxu0 0
    %360 = vmatpush1.bf16.msra.mxu0 %v261
    %361 = vmatprep.subr.bf16.mxu0 0
    %362 = vmatpush1.bf16.msra.mxu0 %v262
    %363 = vmatprep.subr.bf16.mxu0 0
    %364 = vmatpush1.bf16.msra.mxu0 %v263
    %365 = vmatprep.subr.bf16.mxu0 0
    %366 = vmatpush1.bf16.msra.mxu0 %v264
    %367 = vmatprep.subr.bf16.mxu0 0
    %368 = vmatpush1.bf16.msra.mxu0 %v265
    %369 = vmatprep.subr.bf16.mxu0 0
    %370 = vmatpush1.bf16.msra.mxu0 %v266
    %371 = vmatprep.subr.bf16.mxu0 0
    %372 = vmatpush1.bf16.msra.mxu0 %v267
    %373 = vmatprep.subr.bf16.mxu0 0
    %374 = vmatpush1.bf16.msra.mxu0 %v268
    %375 = vmatprep.subr.bf16.mxu0 0
    %376 = vmatpush1.bf16.msra.mxu0 %v269
    %377 = vmatprep.subr.bf16.mxu0 0
    %378 = vmatpush1.bf16.msra.mxu0 %v270
    %379 = vmatprep.subr.bf16.mxu0 0
    %380 = vmatpush1.bf16.msra.mxu0 %v271
    %381 = vmatprep.subr.bf16.mxu0 0
    %382 = vmatpush1.bf16.msra.mxu0 %v272
    %383 = vmatprep.subr.bf16.mxu0 0
    %384 = vmatpush1.bf16.msra.mxu0 %v273
    %385 = vmatprep.subr.bf16.mxu0 0
    %386 = vmatpush1.bf16.msra.mxu0 %v312
    %387 = vmatprep.mubr.bf16.mxu0 %v308
    %388 = vmatmul.mubr.bf16.gmra.mrb[0].mxu0 %v45
    %v389 = vpop.f32.mrb[0].mxu0
    %v390 = vadd.f32 %v349, %v389
    %v391 = vpop.f32.mrb[0].mxu0
    %v392 = vpop.f32.mrb[0].mxu0
    %v393 = vadd.f32 %v352, %v392
    %v394 = vpop.f32.mrb[0].mxu0
    %395 = vdwg.mxu0
    %v396 = vmax.f32 %v390, 0.0
    %v397 = vmax.f32 %v393, 0.0
    %v398 = vpack.c.bf16 %v397, %v396
    %v399 = vld [vmem:[%s3] sm:$0xf]
    %v400 = vld [vmem:[%s3 + $0x4] sm:$0xf]
    %v401 = vld [vmem:[%s3 + $0x8] sm:$0xf]
    %v402 = vld [vmem:[%s3 + $0xc] sm:$0xf]
    %v403 = vld [vmem:[%s3 + $0x10] sm:$0xf]
    %v404 = vld [vmem:[%s3 + $0x14] sm:$0xf]
    %v405 = vld [vmem:[%s3 + $0x18] sm:$0xf]
    %v406 = vld [vmem:[%s3 + $0x1c] sm:$0xf]
    %v407 = vld [vmem:[%s3 + $0x20] sm:$0xf]
    %v408 = vld [vmem:[%s3 + $0x24] sm:$0xf]
    %v409 = vld [vmem:[%s3 + $0x28] sm:$0xf]
    %v410 = vld [vmem:[%s3 + $0x2c] sm:$0xf]
    %v411 = vld [vmem:[%s3 + $0x30] sm:$0xf]
    %v412 = vld [vmem:[%s3 + $0x34] sm:$0xf]
    %v413 = vld [vmem:[%s3 + $0x38] sm:$0xf]
    %v414 = vld [vmem:[%s3 + $0x3c] sm:$0xf]
    %v415 = vld [vmem:[%s4] sm:$0x1]
    %v417 = vlaneseq
    %v418 = vshrl.u32 %v417, 7
    %v419 = vsub.s32 0, %v418
    %v420 = vrot.slane %v415, %v419
    %v438 = vunpack.c.l.b16 %v399
    %v439 = vunpack.c.l.b16 %v400
    %v440 = vunpack.c.l.b16 %v401
    %v441 = vunpack.c.l.b16 %v402
    %v442 = vunpack.c.l.b16 %v403
    %v443 = vunpack.c.l.b16 %v404
    %v444 = vunpack.c.l.b16 %v405
    %v445 = vunpack.c.l.b16 %v406
    %v446 = vunpack.c.l.b16 %v407
    %v447 = vunpack.c.l.b16 %v408
    %v448 = vunpack.c.l.b16 %v409
    %v449 = vunpack.c.l.b16 %v410
    %v450 = vunpack.c.l.b16 %v411
    %v451 = vunpack.c.l.b16 %v412
    %v452 = vunpack.c.l.b16 %v413
    %v453 = vunpack.c.l.b16 %v414
    %v454 = vpack.c.b16 %v439, %v438
    %v455 = vpack.c.b16 %v441, %v440
    %v456 = vpack.c.b16 %v443, %v442
    %v457 = vpack.c.b16 %v445, %v444
    %v458 = vpack.c.b16 %v447, %v446
    %v459 = vpack.c.b16 %v449, %v448
    %v460 = vpack.c.b16 %v451, %v450
    %v461 = vpack.c.b16 %v453, %v452
    %470 = vmatprep.subr.bf16.mxu0 0
    %471 = vmatpush1.bf16.msra.mxu0 %v454
    %472 = vmatprep.subr.bf16.mxu0 0
    %473 = vmatpush1.bf16.msra.mxu0 %v455
    %474 = vmatprep.subr.bf16.mxu0 0
    %475 = vmatpush1.bf16.msra.mxu0 %v456
    %476 = vmatprep.subr.bf16.mxu0 0
    %477 = vmatpush1.bf16.msra.mxu0 %v457
    %478 = vmatprep.subr.bf16.mxu0 0
    %479 = vmatpush1.bf16.msra.mxu0 %v458
    %480 = vmatprep.subr.bf16.mxu0 0
    %481 = vmatpush1.bf16.msra.mxu0 %v459
    %482 = vmatprep.subr.bf16.mxu0 0
    %483 = vmatpush1.bf16.msra.mxu0 %v460
    %484 = vmatprep.subr.bf16.mxu0 0
    %485 = vmatpush1.bf16.msra.mxu0 %v461
    %486 = vmatprep.subr.bf16.mxu0 0
    %487 = vmatpush1.bf16.msra.mxu0 0
    %488 = vmatprep.subr.bf16.mxu0 0
    %489 = vmatpush1.bf16.msra.mxu0 0
    %490 = vmatprep.subr.bf16.mxu0 0
    %491 = vmatpush1.bf16.msra.mxu0 0
    %492 = vmatprep.subr.bf16.mxu0 0
    %493 = vmatpush1.bf16.msra.mxu0 0
    %494 = vmatprep.subr.bf16.mxu0 0
    %495 = vmatpush1.bf16.msra.mxu0 0
    %496 = vmatprep.subr.bf16.mxu0 0
    %497 = vmatpush1.bf16.msra.mxu0 0
    %498 = vmatprep.subr.bf16.mxu0 0
    %499 = vmatpush1.bf16.msra.mxu0 0
    %500 = vmatprep.subr.bf16.mxu0 0
    %501 = vmatpush1.bf16.msra.mxu0 0
    %502 = vmatprep.mubr.bf16.mxu0 0
    %503 = vmatmul.mubr.bf16.gmra.mrb[0].mxu0 %v398
    %v504 = vpop.f32.mrb[0].mxu0
    %v505 = vadd.f32 %v420, %v504
    %v506 = vpop.f32.mrb[0].mxu0
    %v507 = vpop.f32.mrb[0].mxu0
    %v508 = vadd.f32 %v420, %v507
    %v509 = vpop.f32.mrb[0].mxu0
    %510 = vdwg.mxu0
    %511 = vmax.xlane.f32.xlu0 %v505
    %v512 = vpop.xlane.xlu0 %511
    %513 = vmax.xlane.f32.xlu0 %v508
    %v514 = vpop.xlane.xlu0 %513
    %v515 = vsub.f32 %v505, %v512
    %v516 = vsub.f32 %v508, %v514
    %v517 = vmul.f32 %v515, 1.442695
    %v518 = vpow.pop %v517
    %v519 = vmul.f32 %v516, 1.442695
    %v520 = vpow.pop %v519
    %521 = vadd.xlane.f32.xlu0 %v518
    %v522 = vpop.xlane.xlu0 %521
    %523 = vadd.xlane.f32.xlu0 %v520
    %v524 = vpop.xlane.xlu0 %523
    %v525 = vlog2.pop %v522
    %v526 = vmul.f32 %v525, 0.6931472
    %v527 = vlog2.pop %v524
    %v528 = vmul.f32 %v527, 0.6931472
    %v529 = vsub.f32 %v515, %v526
    %v530 = vsub.f32 %v516, %v528
    %531 = vst [vmem:[%s5] sm:$0xff] %v529
    %532 = vst [vmem:[%s5 + $0x8] sm:$0xff] %v530
    // Predicated region
    $region26: #{label_forward.1} parent=1 // pred_check
      _
    $region27: #{label_forward.1} parent=1 // pred_check_branch
      %534 = sbr.rel (0) target = $region29
    $region28: #{label_forward.1} parent=1 // pred_region
      _
    $region29: #{label_forward.1} parent=1 // pred_fallthru
      _
    // Predicated region
    $region30: #{label_forward.1} parent=1 // pred_check
      _
    $region31: #{label_forward.1} parent=1 // pred_check_branch
      %536 = sbr.rel (0) target = $region33
    $region32: #{label_forward.1} parent=1 // pred_region
      _
    $region33: #{label_forward.1} parent=1 // pred_fallthru
      _
    %537 = vsyncpa [#allocation3], 1

</llo_original>
